<compile_context>
chip_gen: v6e
topology: v6e:2x2x1
jax: 0.10.0
libtpu: 0.0.40
codegen_flags: <defaults>
</compile_context>

<pallas_src>
import functools

import jax
import jax.numpy as jnp
from jax.experimental import pallas as pl
from jax.experimental.pallas import tpu as pltpu

BN_EPS = 1e-5


def _pnl_kernel(reduc_ratio,
                xh_ref, xl_ref,
                w_gp_ref, b_gp_ref,    # stacked [g; phi]: (2C, low_dim), (2C, 1)
                wt_ref, bt_ref,        # theta (pre-scaled by 1/M): (C, high_dim), (C, 1)
                ww_ref, bw_ref,        # BN-folded W conv: (high_dim, C), (high_dim, 1)
                z_ref):
    """One grid step == one batch element. Entire PNL forward done in-kernel."""
    C = wt_ref.shape[0]
    N = xh_ref.shape[-1]
    M = N // reduc_ratio

    xh = xh_ref[...]            # (high_dim, N) -- no upcast, MXU takes bf16/f32 natively
    xl = xl_ref[...]            # (low_dim,  N)
    cdt = xh.dtype              # compute dtype fed to the MXU

    # Stacked 1x1 convs g & phi (both consume x_l): one MXU push instead of two.
    gp = jnp.dot(w_gp_ref[...], xl, preferred_element_type=jnp.float32) + b_gp_ref[...]
    g_x = gp[:C]                # (C, N)
    phi_x = gp[C:]              # (C, N)

    # theta 1x1 conv (x_h); the 1/M attention scale is already folded into wt/bt.
    theta_x = jnp.dot(wt_ref[...], xh, preferred_element_type=jnp.float32) + bt_ref[...]

    # attention^T accumulated over the reduc_ratio "view" chunks of the lane axis.
    # att_T[j, m] = sum_{c,h} phi[c, h*M+j] * theta_scaled[c, h*M+m]
    att_t = jnp.zeros((M, M), jnp.float32)
    for h in range(reduc_ratio):
        lo, hi = h * M, (h + 1) * M
        att_t = att_t + jax.lax.dot_general(
            phi_x[:, lo:hi], theta_x[:, lo:hi],
            (((0,), (0,)), ((), ())),           # contract over the C channel rows
            preferred_element_type=jnp.float32)
    att_c = att_t.astype(cdt)

    # y chunks along the lane axis:  y[c, h*M+m] = sum_j g[c, h*M+j] * att_T[j, m]
    y_chunks = []
    for h in range(reduc_ratio):
        lo, hi = h * M, (h + 1) * M
        y_chunks.append(jnp.dot(g_x[:, lo:hi].astype(cdt), att_c,
                                preferred_element_type=jnp.float32))     # (C, M)
    y_full = jnp.concatenate(y_chunks, axis=-1) if reduc_ratio > 1 else y_chunks[0]

    # Single W-conv (+ folded BN bias) over the whole (C, N) slab, then one
    # lane-dense residual store of the full (high_dim, N) tile.
    w_y = jnp.dot(ww_ref[...], y_full.astype(cdt),
                  preferred_element_type=jnp.float32) + bw_ref[...]       # (high_dim, N)
    z_ref[...] = (w_y + xh).astype(z_ref.dtype)


def pnl_forward(x_h, x_l, params, reduc_ratio=2):
    """Pallas PNL forward. x_h: (B, high_dim, H, W), x_l: (B, low_dim, H, W)."""
    B, high_dim, H, W = x_h.shape
    _, low_dim, Hl, Wl = x_l.shape
    assert (H, W) == (Hl, Wl)
    assert low_dim % reduc_ratio == 0
    N = H * W
    assert N % reduc_ratio == 0, "PyTorch view(B, low_dim, -1) requires H*W % reduc_ratio == 0"
    C = low_dim // reduc_ratio
    M = N // reduc_ratio

    xh2 = x_h.reshape(B, high_dim, N)
    xl2 = x_l.reshape(B, low_dim, N)

    f32 = jnp.float32
    cdt = x_h.dtype

    # --- wrapper-side folding (all in f32, cast to compute dtype at the end) ---
    # Eval-mode BN folded into the W conv:  scale = gamma * rsqrt(var + eps)
    scale = params["gamma"].astype(f32) * jax.lax.rsqrt(params["running_var"].astype(f32) + BN_EPS)
    ww = (scale[:, None] * params["ww"].astype(f32)).astype(cdt)
    bw = scale * (params["bw"].astype(f32) - params["running_mean"].astype(f32)) \
        + params["beta"].astype(f32)
    # attention = energy / M folded into theta.
    wt = (params["wt"].astype(f32) * (1.0 / M)).astype(cdt)
    bt = params["bt"].astype(f32) * (1.0 / M)
    # g and phi stacked (both consume x_l).
    w_gp = jnp.concatenate([params["wg"].astype(f32), params["wp"].astype(f32)], axis=0).astype(cdt)
    b_gp = jnp.concatenate([params["bg"].astype(f32), params["bp"].astype(f32)], axis=0)

    def col(v):  # bias columns as (rows, 1) f32 for in-kernel broadcast
        return v.reshape(-1, 1).astype(f32)

    def rep(shape):  # whole array, replicated (batch-invariant) across the grid
        return pl.BlockSpec(shape, lambda b: (0, 0))

    kernel = functools.partial(_pnl_kernel, reduc_ratio)

    z = pl.pallas_call(
        kernel,
        out_shape=jax.ShapeDtypeStruct((B, high_dim, N), x_h.dtype),
        grid=(B,),
        in_specs=[
            pl.BlockSpec((None, high_dim, N), lambda b: (b, 0, 0)),   # x_h
            pl.BlockSpec((None, low_dim, N), lambda b: (b, 0, 0)),    # x_l
            rep((2 * C, low_dim)), rep((2 * C, 1)),                   # stacked g|phi
            rep((C, high_dim)), rep((C, 1)),                          # theta (1/M folded)
            rep((high_dim, C)), rep((high_dim, 1)),                   # W conv (BN folded)
        ],
        out_specs=pl.BlockSpec((None, high_dim, N), lambda b: (b, 0, 0)),
        compiler_params=pltpu.CompilerParams(dimension_semantics=("parallel",)),
    )(xh2, xl2, w_gp, col(b_gp), wt, col(bt), ww, col(bw))

    return z.reshape(B, high_dim, H, W)


def pnl_reference(x_h, x_l, params, reduc_ratio=2):
    """Pure-JAX mirror of the PyTorch PNL.forward (eval-mode BN)."""
    B, high_dim, H, W = x_h.shape
    low_dim = x_l.shape[1]
    C = low_dim // reduc_ratio

    def conv1x1(w, b, x):
        return jnp.einsum("oc,bchw->bohw", w, x) + b[None, :, None, None]

    g = conv1x1(params["wg"], params["bg"], x_l)          # (B, C, H, W)
    th = conv1x1(params["wt"], params["bt"], x_h)         # (B, C, H, W)
    ph = conv1x1(params["wp"], params["bp"], x_l)         # (B, C, H, W)

    g_x = g.reshape(B, low_dim, -1).transpose(0, 2, 1)    # (B, M, low_dim)
    theta_x = th.reshape(B, low_dim, -1).transpose(0, 2, 1)
    phi_x = ph.reshape(B, low_dim, -1)                    # (B, low_dim, M)

    energy = jnp.einsum("bml,blk->bmk", theta_x, phi_x)   # (B, M, M)
    attention = energy / energy.shape[-1]
    y = jnp.einsum("bmk,bkl->bml", attention, g_x)        # (B, M, low_dim)
    y = y.transpose(0, 2, 1).reshape(B, C, H, W)

    w_y = conv1x1(params["ww"], params["bw"], y)
    inv_std = 1.0 / jnp.sqrt(params["running_var"] + BN_EPS)
    w_y = ((w_y - params["running_mean"][None, :, None, None])
           * (inv_std * params["gamma"])[None, :, None, None]
           + params["beta"][None, :, None, None])
    return w_y + x_h


def init_params(key, high_dim, low_dim, reduc_ratio=2):
    """PyTorch Conv2d default init; BN gamma=beta=0 per the module's __init__."""
    C = low_dim // reduc_ratio
    ks = jax.random.split(key, 4)

    def conv_init(k, cout, cin):
        bound = 1.0 / (cin ** 0.5)
        kw, kb = jax.random.split(k)
        w = jax.random.uniform(kw, (cout, cin), jnp.float32, -bound, bound)
        b = jax.random.uniform(kb, (cout,), jnp.float32, -bound, bound)
        return w, b

    wg, bg = conv_init(ks[0], C, low_dim)       # g:     low  -> low//r
    wt, bt = conv_init(ks[1], C, high_dim)      # theta: high -> low//r
    wp, bp = conv_init(ks[2], C, low_dim)       # phi:   low  -> low//r
    ww, bw = conv_init(ks[3], high_dim, C)      # W[0]:  low//r -> high
    return dict(
        wg=wg, bg=bg, wt=wt, bt=bt, wp=wp, bp=bp, ww=ww, bw=bw,
        gamma=jnp.zeros((high_dim,), jnp.float32),          # W[1].weight = 0
        beta=jnp.zeros((high_dim,), jnp.float32),           # W[1].bias   = 0
        running_mean=jnp.zeros((high_dim,), jnp.float32),
        running_var=jnp.ones((high_dim,), jnp.float32),
    )


if __name__ == "__main__":
    key = jax.random.PRNGKey(0)
    k_xh, k_xl, k_p = jax.random.split(key, 3)

    # Small, lane-friendly shapes: N = H*W = 256, M = 128, C = 8.
    B, high_dim, low_dim, H, W = 2, 32, 16, 16, 16
    x_h = jax.random.normal(k_xh, (B, high_dim, H, W), jnp.float32)
    x_l = jax.random.normal(k_xl, (B, low_dim, H, W), jnp.float32)
    params = init_params(k_p, high_dim, low_dim)

    # Faithful module init (BN gamma/beta = 0  =>  z == x_h).
    z = jax.block_until_ready(pnl_forward(x_h, x_l, params))
    z_ref = pnl_reference(x_h, x_l, params)
    assert z.shape == x_h.shape
    assert jnp.allclose(z, x_h, atol=1e-5, rtol=1e-5)
    assert jnp.allclose(z, z_ref, atol=1e-3, rtol=1e-3)

    # Non-trivial BN stats/affine to numerically exercise the full folded
    # theta/phi/g/attention/W path inside the kernel.
    params2 = dict(params)
    params2["gamma"] = jnp.linspace(0.5, 1.5, high_dim).astype(jnp.float32)
    params2["beta"] = jnp.linspace(-0.2, 0.2, high_dim).astype(jnp.float32)
    params2["running_mean"] = jnp.linspace(-0.1, 0.1, high_dim).astype(jnp.float32)
    params2["running_var"] = jnp.linspace(0.5, 1.5, high_dim).astype(jnp.float32)
    z2 = jax.block_until_ready(pnl_forward(x_h, x_l, params2))
    z2_ref = pnl_reference(x_h, x_l, params2)
    assert jnp.allclose(z2, z2_ref, atol=2e-3, rtol=2e-3)

    print("KERNEL_OK")
</pallas_src>

<mosaic_0001>
module attributes {stable_mosaic.version = 11 : i64} {
  func.func @_pnl_kernel(%arg0: i32, %arg1: memref<1x32x256xf32, #tpu.memory_space<vmem>>, %arg2: memref<1x16x256xf32, #tpu.memory_space<vmem>>, %arg3: memref<16x16xf32, #tpu.memory_space<vmem>>, %arg4: memref<16x1xf32, #tpu.memory_space<vmem>>, %arg5: memref<8x32xf32, #tpu.memory_space<vmem>>, %arg6: memref<8x1xf32, #tpu.memory_space<vmem>>, %arg7: memref<32x8xf32, #tpu.memory_space<vmem>>, %arg8: memref<32x1xf32, #tpu.memory_space<vmem>>, %arg9: memref<1x32x256xf32, #tpu.memory_space<vmem>>) attributes {dimension_semantics = [#tpu.dimension_semantics<parallel>], iteration_bounds = array<i64: 2>, scalar_prefetch = 0 : i64, scratch_operands = 0 : i64, tpu.core_type = #tpu.core_type<tc>, window_params = [{transform_indices = @transform_0, window_bounds = array<i64: 1, 32, 256>}, {transform_indices = @transform_1, window_bounds = array<i64: 1, 16, 256>}, {pipeline_mode = #tpu.pipeline_mode<synchronous>, transform_indices = @transform_2, window_bounds = array<i64: 16, 16>}, {pipeline_mode = #tpu.pipeline_mode<synchronous>, transform_indices = @transform_3, window_bounds = array<i64: 16, 1>}, {pipeline_mode = #tpu.pipeline_mode<synchronous>, transform_indices = @transform_4, window_bounds = array<i64: 8, 32>}, {pipeline_mode = #tpu.pipeline_mode<synchronous>, transform_indices = @transform_5, window_bounds = array<i64: 8, 1>}, {pipeline_mode = #tpu.pipeline_mode<synchronous>, transform_indices = @transform_6, window_bounds = array<i64: 32, 8>}, {pipeline_mode = #tpu.pipeline_mode<synchronous>, transform_indices = @transform_7, window_bounds = array<i64: 32, 1>}, {transform_indices = @transform_8, window_bounds = array<i64: 1, 32, 256>}]} {
    %c0 = arith.constant 0 : index
    %c0_0 = arith.constant 0 : index
    %c0_1 = arith.constant 0 : index
    %0 = vector.load %arg1[%c0, %c0_0, %c0_1] : memref<1x32x256xf32, #tpu.memory_space<vmem>>, vector<1x32x256xf32>
    %1 = vector.shape_cast %0 : vector<1x32x256xf32> to vector<32x256xf32>
    %c0_2 = arith.constant 0 : index
    %c0_3 = arith.constant 0 : index
    %c0_4 = arith.constant 0 : index
    %2 = vector.load %arg2[%c0_2, %c0_3, %c0_4] : memref<1x16x256xf32, #tpu.memory_space<vmem>>, vector<1x16x256xf32>
    %3 = vector.shape_cast %2 : vector<1x16x256xf32> to vector<16x256xf32>
    %c0_5 = arith.constant 0 : index
    %c0_6 = arith.constant 0 : index
    %4 = vector.load %arg3[%c0_5, %c0_6] : memref<16x16xf32, #tpu.memory_space<vmem>>, vector<16x16xf32>
    %cst = arith.constant dense<0.000000e+00> : vector<16x256xf32>
    %5 = tpu.matmul %4, %3, %cst {dimension_numbers = #tpu.dot_dimension_numbers<[1], [0], [0], [1], [0, 0, 1, 1], [], []>} : vector<16x16xf32>, vector<16x256xf32>, vector<16x256xf32> -> vector<16x256xf32>
    %c0_7 = arith.constant 0 : index
    %c0_8 = arith.constant 0 : index
    %6 = vector.load %arg4[%c0_7, %c0_8] : memref<16x1xf32, #tpu.memory_space<vmem>>, vector<16x1xf32>
    %7 = vector.broadcast %6 : vector<16x1xf32> to vector<16x256xf32>
    %8 = arith.addf %5, %7 : vector<16x256xf32>
    %9 = vector.extract_strided_slice %8 {offsets = [0, 0], sizes = [8, 256], strides = [1, 1]} : vector<16x256xf32> to vector<8x256xf32>
    %10 = vector.extract_strided_slice %8 {offsets = [8, 0], sizes = [8, 256], strides = [1, 1]} : vector<16x256xf32> to vector<8x256xf32>
    %c0_9 = arith.constant 0 : index
    %c0_10 = arith.constant 0 : index
    %11 = vector.load %arg5[%c0_9, %c0_10] : memref<8x32xf32, #tpu.memory_space<vmem>>, vector<8x32xf32>
    %cst_11 = arith.constant dense<0.000000e+00> : vector<8x256xf32>
    %12 = tpu.matmul %11, %1, %cst_11 {dimension_numbers = #tpu.dot_dimension_numbers<[1], [0], [0], [1], [0, 0, 1, 1], [], []>} : vector<8x32xf32>, vector<32x256xf32>, vector<8x256xf32> -> vector<8x256xf32>
    %c0_12 = arith.constant 0 : index
    %c0_13 = arith.constant 0 : index
    %13 = vector.load %arg6[%c0_12, %c0_13] : memref<8x1xf32, #tpu.memory_space<vmem>>, vector<8x1xf32>
    %14 = vector.broadcast %13 : vector<8x1xf32> to vector<8x256xf32>
    %15 = arith.addf %12, %14 : vector<8x256xf32>
    %cst_14 = arith.constant 0.000000e+00 : f32
    %16 = vector.broadcast %cst_14 : f32 to vector<128x128xf32>
    %17 = vector.extract_strided_slice %10 {offsets = [0, 0], sizes = [8, 128], strides = [1, 1]} : vector<8x256xf32> to vector<8x128xf32>
    %18 = vector.extract_strided_slice %15 {offsets = [0, 0], sizes = [8, 128], strides = [1, 1]} : vector<8x256xf32> to vector<8x128xf32>
    %cst_15 = arith.constant dense<0.000000e+00> : vector<128x128xf32>
    %19 = tpu.matmul %17, %18, %cst_15 {dimension_numbers = #tpu.dot_dimension_numbers<[0], [0], [1], [1], [0, 1, 1, 1], [], []>} : vector<8x128xf32>, vector<8x128xf32>, vector<128x128xf32> -> vector<128x128xf32>
    %20 = arith.addf %16, %19 : vector<128x128xf32>
    %21 = vector.extract_strided_slice %10 {offsets = [0, 128], sizes = [8, 128], strides = [1, 1]} : vector<8x256xf32> to vector<8x128xf32>
    %22 = vector.extract_strided_slice %15 {offsets = [0, 128], sizes = [8, 128], strides = [1, 1]} : vector<8x256xf32> to vector<8x128xf32>
    %cst_16 = arith.constant dense<0.000000e+00> : vector<128x128xf32>
    %23 = tpu.matmul %21, %22, %cst_16 {dimension_numbers = #tpu.dot_dimension_numbers<[0], [0], [1], [1], [0, 1, 1, 1], [], []>} : vector<8x128xf32>, vector<8x128xf32>, vector<128x128xf32> -> vector<128x128xf32>
    %24 = arith.addf %20, %23 : vector<128x128xf32>
    %25 = vector.extract_strided_slice %9 {offsets = [0, 0], sizes = [8, 128], strides = [1, 1]} : vector<8x256xf32> to vector<8x128xf32>
    %cst_17 = arith.constant dense<0.000000e+00> : vector<8x128xf32>
    %26 = tpu.matmul %25, %24, %cst_17 {dimension_numbers = #tpu.dot_dimension_numbers<[1], [0], [0], [1], [0, 0, 1, 1], [], []>} : vector<8x128xf32>, vector<128x128xf32>, vector<8x128xf32> -> vector<8x128xf32>
    %27 = vector.extract_strided_slice %9 {offsets = [0, 128], sizes = [8, 128], strides = [1, 1]} : vector<8x256xf32> to vector<8x128xf32>
    %cst_18 = arith.constant dense<0.000000e+00> : vector<8x128xf32>
    %28 = tpu.matmul %27, %24, %cst_18 {dimension_numbers = #tpu.dot_dimension_numbers<[1], [0], [0], [1], [0, 0, 1, 1], [], []>} : vector<8x128xf32>, vector<128x128xf32>, vector<8x128xf32> -> vector<8x128xf32>
    %29 = tpu.concatenate %26, %28 in 1 : vector<8x128xf32>, vector<8x128xf32> -> vector<8x256xf32>
    %c0_19 = arith.constant 0 : index
    %c0_20 = arith.constant 0 : index
    %30 = vector.load %arg7[%c0_19, %c0_20] : memref<32x8xf32, #tpu.memory_space<vmem>>, vector<32x8xf32>
    %cst_21 = arith.constant dense<0.000000e+00> : vector<32x256xf32>
    %31 = tpu.matmul %30, %29, %cst_21 {dimension_numbers = #tpu.dot_dimension_numbers<[1], [0], [0], [1], [0, 0, 1, 1], [], []>} : vector<32x8xf32>, vector<8x256xf32>, vector<32x256xf32> -> vector<32x256xf32>
    %c0_22 = arith.constant 0 : index
    %c0_23 = arith.constant 0 : index
    %32 = vector.load %arg8[%c0_22, %c0_23] : memref<32x1xf32, #tpu.memory_space<vmem>>, vector<32x1xf32>
    %33 = vector.broadcast %32 : vector<32x1xf32> to vector<32x256xf32>
    %34 = arith.addf %31, %33 : vector<32x256xf32>
    %35 = arith.addf %34, %1 : vector<32x256xf32>
    %c0_24 = arith.constant 0 : index
    %c0_25 = arith.constant 0 : index
    %c0_26 = arith.constant 0 : index
    %36 = vector.load %arg9[%c0_24, %c0_25, %c0_26] : memref<1x32x256xf32, #tpu.memory_space<vmem>>, vector<1x32x256xf32>
    %37 = vector.shape_cast %36 : vector<1x32x256xf32> to vector<32x256xf32>
    %38 = vector.shape_cast %35 : vector<32x256xf32> to vector<1x32x256xf32>
    tpu.vector_store %arg9[%c0_24, %c0_25, %c0_26], %38 {strides = array<i32>} : memref<1x32x256xf32, #tpu.memory_space<vmem>>, vector<1x32x256xf32>,
    return
  }
  func.func @transform_0(%arg0: i32) -> (i32, i32, i32) {
    %c0_i32 = arith.constant 0 : i32
    %c0_i32_0 = arith.constant 0 : i32
    %c0_i32_1 = arith.constant 0 : i32
    return %arg0, %c0_i32, %c0_i32_0 : i32, i32, i32
  }
  func.func @transform_1(%arg0: i32) -> (i32, i32, i32) {
    %c0_i32 = arith.constant 0 : i32
    %c0_i32_0 = arith.constant 0 : i32
    %c0_i32_1 = arith.constant 0 : i32
    return %arg0, %c0_i32, %c0_i32_0 : i32, i32, i32
  }
  func.func @transform_2(%arg0: i32) -> (i32, i32) {
    %c0_i32 = arith.constant 0 : i32
    %c0_i32_0 = arith.constant 0 : i32
    %c0_i32_1 = arith.constant 0 : i32
    return %c0_i32, %c0_i32_0 : i32, i32
  }
  func.func @transform_3(%arg0: i32) -> (i32, i32) {
    %c0_i32 = arith.constant 0 : i32
    %c0_i32_0 = arith.constant 0 : i32
    %c0_i32_1 = arith.constant 0 : i32
    return %c0_i32, %c0_i32_0 : i32, i32
  }
  func.func @transform_4(%arg0: i32) -> (i32, i32) {
    %c0_i32 = arith.constant 0 : i32
    %c0_i32_0 = arith.constant 0 : i32
    %c0_i32_1 = arith.constant 0 : i32
    return %c0_i32, %c0_i32_0 : i32, i32
  }
  func.func @transform_5(%arg0: i32) -> (i32, i32) {
    %c0_i32 = arith.constant 0 : i32
    %c0_i32_0 = arith.constant 0 : i32
    %c0_i32_1 = arith.constant 0 : i32
    return %c0_i32, %c0_i32_0 : i32, i32
  }
  func.func @transform_6(%arg0: i32) -> (i32, i32) {
    %c0_i32 = arith.constant 0 : i32
    %c0_i32_0 = arith.constant 0 : i32
    %c0_i32_1 = arith.constant 0 : i32
    return %c0_i32, %c0_i32_0 : i32, i32
  }
  func.func @transform_7(%arg0: i32) -> (i32, i32) {
    %c0_i32 = arith.constant 0 : i32
    %c0_i32_0 = arith.constant 0 : i32
    %c0_i32_1 = arith.constant 0 : i32
    return %c0_i32, %c0_i32_0 : i32, i32
  }
  func.func @transform_8(%arg0: i32) -> (i32, i32, i32) {
    %c0_i32 = arith.constant 0 : i32
    %c0_i32_0 = arith.constant 0 : i32
    %c0_i32_1 = arith.constant 0 : i32
    return %arg0, %c0_i32, %c0_i32_0 : i32, i32, i32
  }
}

</mosaic_0001>

<llo_original>
// kernel: tpu_custom_call.1
$region0: #{tpu_custom_call.1}
  #allocation0 [shape = 'u32[]', space=smem, size = 0x4, offset = 0x4, fixed_abs, tag = 'smem constant byte address 0x4 - core index']
  #allocation1 [shape = 'u32[144,128]{1,0:T(1,128)}', space=vmem, size = 0x12000, scoped, tag = 'internal scratch']
  %s0 = inlined_call_operand.hbm [shape: f32[2,32,256], index: 0, kind: input, shape index: {}]
  %s1 = inlined_call_operand.vmem [shape: f32[2,16,256], index: 1, kind: input, shape index: {}]
  %s2 = inlined_call_operand.vmem [shape: f32[16,16], index: 2, kind: input, shape index: {}]
  %s3 = inlined_call_operand.vmem [shape: f32[16,1], index: 3, kind: input, shape index: {}]
  %s4 = inlined_call_operand.vmem [shape: f32[8,32], index: 4, kind: input, shape index: {}]
  %s5 = inlined_call_operand.vmem [shape: f32[8,1], index: 5, kind: input, shape index: {}]
  %s6 = inlined_call_operand.vmem [shape: f32[32,8], index: 6, kind: input, shape index: {}]
  %s7 = inlined_call_operand.vmem [shape: f32[32,1], index: 7, kind: input, shape index: {}]
  %s8 = inlined_call_operand.hbm [shape: f32[2,32,256], index: 8, kind: output, shape index: {}]
  %s9 = sld [smem:[#allocation0]]
  $region69: #{tpu_custom_call.1} parent=0
    _
  %s11 = ssub.s32 1, %s9
  %s12 = scalar_select 0, %s11, %s9
  $region1: #{tpu_custom_call.1} parent=0
    #allocation2 [shape = 'u8[65536]{0}', space=vmem, size = 0x10000, scoped, tag = 'input window, operand 0']
    #allocation3 [shape = 's32[2]{0}', space=sflag, size = 0x8, scoped, tag = 'scoped memory for tpu_custom_call.1']
    #allocation4 [shape = 's32[2]{0}', space=sflag, size = 0x8, scoped, tag = 'scoped memory for tpu_custom_call.1']
    #allocation5 [shape = 'u8[65536]{0}', space=vmem, size = 0x10000, scoped, tag = 'output window, operand 0']
    %13 = vsyncpa [#allocation3], 0
    %s14 = scalar_lea.sflag [#allocation3], 1
    %15 = vsyncpa %s14, 0
    %16 = vsyncpa [#allocation4], 0
    %s17 = scalar_lea.sflag [#allocation4], 1
    %18 = vsyncpa %s17, 0
    loop: start=0, step=1, limit=4
    $region2: #{tpu_custom_call.1} parent=1 // loop_pre_header
      _
    $region3: #{tpu_custom_call.1} parent=1 // loop_header
      %s20 = sphi 0, %s24
      %p21 = scmp.ge.s32.totalorder %s20, 4
      %s30 = sphi 0, %s32
      %s33 = sphi 0, %s30
      %s34 = sphi 0, %s33
      %s50 = sphi 0, %s34
      %s56 = sphi 0, %s58
      %s59 = sphi 0, %s56
      %s60 = sphi 0, %s59
      %s76 = sphi 0, %s60
      %s80 = sphi 0, %s80
      %s82 = sphi 0, %s80
      %s83 = sphi 0, %s82
      %s97 = sphi 0, %s83
      %s101 = sphi 0, %s101
      %s103 = sphi 0, %s101
      %s104 = sphi 0, %s103
      %s118 = sphi 0, %s104
      %s122 = sphi 0, %s122
      %s124 = sphi 0, %s122
      %s125 = sphi 0, %s124
      %s139 = sphi 0, %s125
      %s143 = sphi 0, %s143
      %s145 = sphi 0, %s143
      %s146 = sphi 0, %s145
      %s160 = sphi 0, %s146
      %s164 = sphi 0, %s164
      %s166 = sphi 0, %s164
      %s167 = sphi 0, %s166
      %s181 = sphi 0, %s167
      %s185 = sphi 0, %s185
      %s187 = sphi 0, %s185
      %s188 = sphi 0, %s187
      %s202 = sphi 0, %s188
      %s208 = sphi 0, %s210
      %s211 = sphi 0, %s208
      %s212 = sphi 0, %s211
      %s228 = sphi 0, %s212
    $region4: #{tpu_custom_call.1} parent=1 // loop_header_branch
      %23 = sbr.rel (%p21) target = $region8
    $region5: #{tpu_custom_call.1} parent=1 // loop_body
      %s25 = ssub.s32 %s20, 1
      %s26 = ssub.s32 %s20, 2
      %s27 = sadd.s32 %s20, 1
      %s28 = ssub.s32 %s20, %s27
      %p29 = scmp.eq.s32.totalorder %s28, 0
      %s31 = sadd.s32 %s30, 1
      %s32 = scalar_select %p29, %s30, %s31
      %p35 = pneg %p29
      %p36 = scmp.eq.s32.totalorder %s20, 1
      %p37 = por %p35, %p36
      %p38 = scmp.ne.s32.totalorder %s30, %s33
      %p39 = scmp.eq.s32.totalorder %s20, 0
      %p40 = por %p38, %p39
      %p41 = scmp.ne.s32.totalorder %s30, %s33
      %p42 = scmp.eq.s32.totalorder %s25, 1
      %p43 = por %p41, %p42
      %p44 = scmp.ne.s32.totalorder %s33, %s34
      %p45 = scmp.eq.s32.totalorder %s25, 0
      %p46 = por %p44, %p45
      %p47 = scmp.ne.s32.totalorder %s33, %s34
      %p48 = scmp.eq.s32.totalorder %s26, 1
      %p49 = por %p47, %p48
      %p51 = scmp.ne.s32.totalorder %s34, %s50
      %p52 = scmp.eq.s32.totalorder %s26, 0
      %p53 = por %p51, %p52
      %s54 = ssub.s32 %s20, %s27
      %p55 = scmp.eq.s32.totalorder %s54, 0
      %s57 = sadd.s32 %s56, 1
      %s58 = scalar_select %p55, %s56, %s57
      %p61 = pneg %p55
      %p62 = scmp.eq.s32.totalorder %s20, 1
      %p63 = por %p61, %p62
      %p64 = scmp.ne.s32.totalorder %s56, %s59
      %p65 = scmp.eq.s32.totalorder %s20, 0
      %p66 = por %p64, %p65
      %p67 = scmp.ne.s32.totalorder %s56, %s59
      %p68 = scmp.eq.s32.totalorder %s25, 1
      %p69 = por %p67, %p68
      %p70 = scmp.ne.s32.totalorder %s59, %s60
      %p71 = scmp.eq.s32.totalorder %s25, 0
      %p72 = por %p70, %p71
      %p73 = scmp.ne.s32.totalorder %s59, %s60
      %p74 = scmp.eq.s32.totalorder %s26, 1
      %p75 = por %p73, %p74
      %p77 = scmp.ne.s32.totalorder %s60, %s76
      %p78 = scmp.eq.s32.totalorder %s26, 0
      %p79 = por %p77, %p78
      %s81 = sadd.s32 %s80, 1
      %p84 = scmp.eq.s32.totalorder %s20, 1
      %p85 = scmp.ne.s32.totalorder %s80, %s82
      %p86 = scmp.eq.s32.totalorder %s20, 0
      %p87 = por %p85, %p86
      %p88 = scmp.ne.s32.totalorder %s80, %s82
      %p89 = scmp.eq.s32.totalorder %s25, 1
      %p90 = por %p88, %p89
      %p91 = scmp.ne.s32.totalorder %s82, %s83
      %p92 = scmp.eq.s32.totalorder %s25, 0
      %p93 = por %p91, %p92
      %p94 = scmp.ne.s32.totalorder %s82, %s83
      %p95 = scmp.eq.s32.totalorder %s26, 1
      %p96 = por %p94, %p95
      %p98 = scmp.ne.s32.totalorder %s83, %s97
      %p99 = scmp.eq.s32.totalorder %s26, 0
      %p100 = por %p98, %p99
      %s102 = sadd.s32 %s101, 1
      %p105 = scmp.eq.s32.totalorder %s20, 1
      %p106 = scmp.ne.s32.totalorder %s101, %s103
      %p107 = scmp.eq.s32.totalorder %s20, 0
      %p108 = por %p106, %p107
      %p109 = scmp.ne.s32.totalorder %s101, %s103
      %p110 = scmp.eq.s32.totalorder %s25, 1
      %p111 = por %p109, %p110
      %p112 = scmp.ne.s32.totalorder %s103, %s104
      %p113 = scmp.eq.s32.totalorder %s25, 0
      %p114 = por %p112, %p113
      %p115 = scmp.ne.s32.totalorder %s103, %s104
      %p116 = scmp.eq.s32.totalorder %s26, 1
      %p117 = por %p115, %p116
      %p119 = scmp.ne.s32.totalorder %s104, %s118
      %p120 = scmp.eq.s32.totalorder %s26, 0
      %p121 = por %p119, %p120
      %s123 = sadd.s32 %s122, 1
      %p126 = scmp.eq.s32.totalorder %s20, 1
      %p127 = scmp.ne.s32.totalorder %s122, %s124
      %p128 = scmp.eq.s32.totalorder %s20, 0
      %p129 = por %p127, %p128
      %p130 = scmp.ne.s32.totalorder %s122, %s124
      %p131 = scmp.eq.s32.totalorder %s25, 1
      %p132 = por %p130, %p131
      %p133 = scmp.ne.s32.totalorder %s124, %s125
      %p134 = scmp.eq.s32.totalorder %s25, 0
      %p135 = por %p133, %p134
      %p136 = scmp.ne.s32.totalorder %s124, %s125
      %p137 = scmp.eq.s32.totalorder %s26, 1
      %p138 = por %p136, %p137
      %p140 = scmp.ne.s32.totalorder %s125, %s139
      %p141 = scmp.eq.s32.totalorder %s26, 0
      %p142 = por %p140, %p141
      %s144 = sadd.s32 %s143, 1
      %p147 = scmp.eq.s32.totalorder %s20, 1
      %p148 = scmp.ne.s32.totalorder %s143, %s145
      %p149 = scmp.eq.s32.totalorder %s20, 0
      %p150 = por %p148, %p149
      %p151 = scmp.ne.s32.totalorder %s143, %s145
      %p152 = scmp.eq.s32.totalorder %s25, 1
      %p153 = por %p151, %p152
      %p154 = scmp.ne.s32.totalorder %s145, %s146
      %p155 = scmp.eq.s32.totalorder %s25, 0
      %p156 = por %p154, %p155
      %p157 = scmp.ne.s32.totalorder %s145, %s146
      %p158 = scmp.eq.s32.totalorder %s26, 1
      %p159 = por %p157, %p158
      %p161 = scmp.ne.s32.totalorder %s146, %s160
      %p162 = scmp.eq.s32.totalorder %s26, 0
      %p163 = por %p161, %p162
      %s165 = sadd.s32 %s164, 1
      %p168 = scmp.eq.s32.totalorder %s20, 1
      %p169 = scmp.ne.s32.totalorder %s164, %s166
      %p170 = scmp.eq.s32.totalorder %s20, 0
      %p171 = por %p169, %p170
      %p172 = scmp.ne.s32.totalorder %s164, %s166
      %p173 = scmp.eq.s32.totalorder %s25, 1
      %p174 = por %p172, %p173
      %p175 = scmp.ne.s32.totalorder %s166, %s167
      %p176 = scmp.eq.s32.totalorder %s25, 0
      %p177 = por %p175, %p176
      %p178 = scmp.ne.s32.totalorder %s166, %s167
      %p179 = scmp.eq.s32.totalorder %s26, 1
      %p180 = por %p178, %p179
      %p182 = scmp.ne.s32.totalorder %s167, %s181
      %p183 = scmp.eq.s32.totalorder %s26, 0
      %p184 = por %p182, %p183
      %s186 = sadd.s32 %s185, 1
      %p189 = scmp.eq.s32.totalorder %s20, 1
      %p190 = scmp.ne.s32.totalorder %s185, %s187
      %p191 = scmp.eq.s32.totalorder %s20, 0
      %p192 = por %p190, %p191
      %p193 = scmp.ne.s32.totalorder %s185, %s187
      %p194 = scmp.eq.s32.totalorder %s25, 1
      %p195 = por %p193, %p194
      %p196 = scmp.ne.s32.totalorder %s187, %s188
      %p197 = scmp.eq.s32.totalorder %s25, 0
      %p198 = por %p196, %p197
      %p199 = scmp.ne.s32.totalorder %s187, %s188
      %p200 = scmp.eq.s32.totalorder %s26, 1
      %p201 = por %p199, %p200
      %p203 = scmp.ne.s32.totalorder %s188, %s202
      %p204 = scmp.eq.s32.totalorder %s26, 0
      %p205 = por %p203, %p204
      %s206 = ssub.s32 %s20, %s27
      %p207 = scmp.eq.s32.totalorder %s206, 0
      %s209 = sadd.s32 %s208, 1
      %s210 = scalar_select %p207, %s208, %s209
      %p213 = pneg %p207
      %p214 = scmp.eq.s32.totalorder %s20, 1
      %p215 = por %p213, %p214
      %p216 = scmp.ne.s32.totalorder %s208, %s211
      %p217 = scmp.eq.s32.totalorder %s20, 0
      %p218 = por %p216, %p217
      %p219 = scmp.ne.s32.totalorder %s208, %s211
      %p220 = scmp.eq.s32.totalorder %s25, 1
      %p221 = por %p219, %p220
      %p222 = scmp.ne.s32.totalorder %s211, %s212
      %p223 = scmp.eq.s32.totalorder %s25, 0
      %p224 = por %p222, %p223
      %p225 = scmp.ne.s32.totalorder %s211, %s212
      %p226 = scmp.eq.s32.totalorder %s26, 1
      %p227 = por %p225, %p226
      %p229 = scmp.ne.s32.totalorder %s212, %s228
      %p230 = scmp.eq.s32.totalorder %s26, 0
      %p231 = por %p229, %p230
      %p232 = scmp.le.s32.totalorder 1, %s20
      %p233 = scmp.lt.s32.totalorder %s20, 3
      %p234 = pnand %p232, %p233
      %p235 = pneg %p234
      // Predicated region
      $region9: #{tpu_custom_call.1} parent=5 // pred_check
        _
      $region10: #{tpu_custom_call.1} parent=5 // pred_check_branch
        %237 = sbr.rel (%p234) target = $region12
      $region11: #{tpu_custom_call.1} parent=5 // pred_region
        %s238 = ssub.s32 %s20, 1
        // Predicated region
        $region13: #{tpu_custom_call.1} parent=11 // pred_check
          %p239 = pneg %p93
        $region14: #{tpu_custom_call.1} parent=11 // pred_check_branch
          %241 = sbr.rel (%p239) target = $region16
        $region15: #{tpu_custom_call.1} parent=11 // pred_region
          _
        $region16: #{tpu_custom_call.1} parent=11 // pred_fallthru
          _
        // Predicated region
        $region17: #{tpu_custom_call.1} parent=11 // pred_check
          %p242 = pneg %p114
        $region18: #{tpu_custom_call.1} parent=11 // pred_check_branch
          %244 = sbr.rel (%p242) target = $region20
        $region19: #{tpu_custom_call.1} parent=11 // pred_region
          _
        $region20: #{tpu_custom_call.1} parent=11 // pred_fallthru
          _
        // Predicated region
        $region21: #{tpu_custom_call.1} parent=11 // pred_check
          %p245 = pneg %p135
        $region22: #{tpu_custom_call.1} parent=11 // pred_check_branch
          %247 = sbr.rel (%p245) target = $region24
        $region23: #{tpu_custom_call.1} parent=11 // pred_region
          _
        $region24: #{tpu_custom_call.1} parent=11 // pred_fallthru
          _
        // Predicated region
        $region25: #{tpu_custom_call.1} parent=11 // pred_check
          %p248 = pneg %p156
        $region26: #{tpu_custom_call.1} parent=11 // pred_check_branch
          %250 = sbr.rel (%p248) target = $region28
        $region27: #{tpu_custom_call.1} parent=11 // pred_region
          _
        $region28: #{tpu_custom_call.1} parent=11 // pred_fallthru
          _
        // Predicated region
        $region29: #{tpu_custom_call.1} parent=11 // pred_check
          %p251 = pneg %p177
        $region30: #{tpu_custom_call.1} parent=11 // pred_check_branch
          %253 = sbr.rel (%p251) target = $region32
        $region31: #{tpu_custom_call.1} parent=11 // pred_region
          _
        $region32: #{tpu_custom_call.1} parent=11 // pred_fallthru
          _
        // Predicated region
        $region33: #{tpu_custom_call.1} parent=11 // pred_check
          %p254 = pneg %p198
        $region34: #{tpu_custom_call.1} parent=11 // pred_check_branch
          %256 = sbr.rel (%p254) target = $region36
        $region35: #{tpu_custom_call.1} parent=11 // pred_region
          _
        $region36: #{tpu_custom_call.1} parent=11 // pred_fallthru
          _
      $region12: #{tpu_custom_call.1} parent=5 // pred_fallthru
        _
      %p257 = scmp.lt.s32.totalorder %s20, 2
      // Predicated region
      $region37: #{tpu_custom_call.1} parent=5 // pred_check
        %p258 = pneg %p257
      $region38: #{tpu_custom_call.1} parent=5 // pred_check_branch
        %260 = sbr.rel (%p258) target = $region40
      $region39: #{tpu_custom_call.1} parent=5 // pred_region
        // Predicated region
        $region41: #{tpu_custom_call.1} parent=39 // pred_check
          %p261 = pneg %p40
        $region42: #{tpu_custom_call.1} parent=39 // pred_check_branch
          %263 = sbr.rel (%p261) target = $region44
        $region43: #{tpu_custom_call.1} parent=39 // pred_region
          %s264 = sand.u32 %s30, 1
          %s265 = scalar_lea.sflag [#allocation3], %s264
          %s266 = sand.u32 %s30, 1
          %s267 = smul.addr %s266, 64
          %s268 = scalar_lea.vmem [#allocation2], %s267
          %s270 = ssub.s32 1024, 1024
          %271 = vsyncadd %s265, %s270
          %s272 = smul.addr %s20, 8
          %s273 = smul.addr %s272, 128
          %s274 = scalar_lea.hbm %s0, %s273
          %s275 = sshll.u32 %s268, 4
          %s276 = int_to_ptr.vmem [resolvable:$true] %s275
          %281 = dma.hbm_to_vmem [thread:$0]  %s274, 1024, %s276, %s265, 256, 256, 16
        $region44: #{tpu_custom_call.1} parent=39 // pred_fallthru
          _
        // Predicated region
        $region45: #{tpu_custom_call.1} parent=39 // pred_check
          %p282 = pneg %p66
        $region46: #{tpu_custom_call.1} parent=39 // pred_check_branch
          %284 = sbr.rel (%p282) target = $region48
        $region47: #{tpu_custom_call.1} parent=39 // pred_region
          %p285 = scmp.lt.s32.totalorder %s20, 1
          %s286 = scalar_select %p285, %s20, 1
          %s287 = smul.addr %s286, 4
          %s288 = smul.addr %s287, 8
          %s289 = scalar_lea.vmem %s1, %s288
        $region48: #{tpu_custom_call.1} parent=39 // pred_fallthru
          _
      $region40: #{tpu_custom_call.1} parent=5 // pred_fallthru
        _
      %p290 = scmp.le.s32.totalorder 1, %s20
      %p291 = scmp.lt.s32.totalorder %s20, 3
      %p292 = pnand %p290, %p291
      %p293 = pneg %p292
      // Predicated region
      $region49: #{tpu_custom_call.1} parent=5 // pred_check
        _
      $region50: #{tpu_custom_call.1} parent=5 // pred_check_branch
        %295 = sbr.rel (%p292) target = $region52
      $region51: #{tpu_custom_call.1} parent=5 // pred_region
        %s296 = ssub.s32 %s20, 1
        %s297 = sand.u32 %s33, 1
        %s298 = scalar_lea.sflag [#allocation3], %s297
        %s299 = sand.u32 %s33, 1
        %s300 = smul.addr %s299, 64
        %s301 = scalar_lea.vmem [#allocation2], %s300
        // Predicated region
        $region53: #{tpu_custom_call.1} parent=51 // pred_check
          %p302 = pneg %p46
        $region54: #{tpu_custom_call.1} parent=51 // pred_check_branch
          %304 = sbr.rel (%p302) target = $region56
        $region55: #{tpu_custom_call.1} parent=51 // pred_region
          %305 = dma.done %s298, 1024
        $region56: #{tpu_custom_call.1} parent=51 // pred_fallthru
          _
        %s306 = sand.u32 %s33, 1
        %s307 = scalar_lea.sflag [#allocation3], %s306
        %s308 = sand.u32 %s33, 1
        %s309 = smul.addr %s308, 64
        %s310 = scalar_lea.vmem [#allocation2], %s309
        %p311 = pneg %p46
        %p312 = pneg %p43
        %p313 = scmp.lt.s32.totalorder %s25, 1
        %s314 = scalar_select %p313, %s25, 1
        %s315 = smul.addr %s314, 4
        %s316 = smul.addr %s315, 8
        %s317 = scalar_lea.vmem %s1, %s316
        %p318 = pneg %p72
        %p319 = pneg %p69
        %p320 = pneg %p93
        %p321 = pneg %p90
        %p322 = pneg %p114
        %p323 = pneg %p111
        %p324 = pneg %p135
        %p325 = pneg %p132
        %p326 = pneg %p156
        %p327 = pneg %p153
        %p328 = pneg %p177
        %p329 = pneg %p174
        %p330 = pneg %p198
        %p331 = pneg %p195
        %p332 = pneg %p224
        %p333 = pneg %p221
        %s334 = sand.u32 %s211, 1
        %s335 = scalar_lea.sflag [#allocation4], %s334
        %s336 = sand.u32 %s211, 1
        %s337 = smul.addr %s336, 64
        %s338 = scalar_lea.vmem [#allocation5], %s337
        %p339 = scmp.lt.s32.totalorder %s25, 1
        %s340 = scalar_select %p339, %s25, 1
        %s341 = smul.addr %s340, 4
        %s342 = smul.addr %s341, 8
        %s343 = scalar_lea.vmem %s1, %s342
        %v344 = vld [vmem:[%s301] sm:$0xff]
        %v345 = vld [vmem:[%s301 + $0x8] sm:$0xff]
        %v346 = vld [vmem:[%s301 + $0x10] sm:$0xff]
        %v347 = vld [vmem:[%s301 + $0x18] sm:$0xff]
        %v348 = vld [vmem:[%s301 + $0x20] sm:$0xff]
        %v349 = vld [vmem:[%s301 + $0x28] sm:$0xff]
        %v350 = vld [vmem:[%s301 + $0x30] sm:$0xff]
        %v351 = vld [vmem:[%s301 + $0x38] sm:$0xff]
        %v352 = vld [vmem:[%s343] sm:$0xff]
        %v353 = vld [vmem:[%s343 + $0x8] sm:$0xff]
        %v354 = vld [vmem:[%s343 + $0x10] sm:$0xff]
        %v355 = vld [vmem:[%s343 + $0x18] sm:$0xff]
        %v356 = vld [vmem:[%s2] sm:$0xff]
        %v357 = vld [vmem:[%s2 + $0x8] sm:$0xff]
        %v358 = vld [vmem:[%s3] sm:$0xff]
        %v359 = vld [vmem:[%s3 + $0x8] sm:$0xff]
        %361 = vset.pattern.permute.xlu0 0
        %362 = vperm.xlu0 %361, %v358
        %v363 = vpop.permute.xlu0 %362
        %366 = vset.pattern.permute.xlu0 0
        %367 = vperm.xlu0 %366, %v359
        %v368 = vpop.permute.xlu0 %367
        %vm370 = vcmask 130048
        %v372 = vsel %vm370, %v356, 0
        %v375 = vsel %vm370, %v357, 0
        %377 = vmatprep.subr.mxu0 0.0
        %378 = vmatpush1.msra.mxu0 0.0
        %379 = vmatprep.subr.mxu0 0.0
        %380 = vmatpush1.msra.mxu0 0.0
        %381 = vmatprep.subr.mxu0 0.0
        %382 = vmatpush1.msra.mxu0 0.0
        %383 = vmatprep.subr.mxu0 0.0
        %384 = vmatpush1.msra.mxu0 0.0
        %385 = vmatprep.subr.mxu0 0.0
        %386 = vmatpush1.msra.mxu0 0.0
        %387 = vmatprep.subr.mxu0 0.0
        %388 = vmatpush1.msra.mxu0 0.0
        %389 = vmatprep.subr.mxu0 0.0
        %390 = vmatpush1.msra.mxu0 0.0
        %391 = vmatprep.subr.mxu0 0.0
        %392 = vmatpush1.msra.mxu0 0.0
        %393 = vmatprep.subr.mxu0 0.0
        %394 = vmatpush1.msra.mxu0 0.0
        %395 = vmatprep.subr.mxu0 0.0
        %396 = vmatpush1.msra.mxu0 0.0
        %397 = vmatprep.subr.mxu0 0.0
        %398 = vmatpush1.msra.mxu0 0.0
        %399 = vmatprep.subr.mxu0 0.0
        %400 = vmatpush1.msra.mxu0 0.0
        %401 = vmatprep.subr.mxu0 0.0
        %402 = vmatpush1.msra.mxu0 0.0
        %403 = vmatprep.subr.mxu0 0.0
        %404 = vmatpush1.msra.mxu0 0.0
        %405 = vmatprep.subr.mxu0 %v355
        %406 = vmatpush1.msra.mxu0 %v354
        %407 = vmatprep.subr.mxu0 %v353
        %408 = vmatpush1.msra.mxu0 %v352
        %409 = vmatprep.subr.mxu0 0.0
        %410 = vmatpush2.msra.mxu0 0.0
        %411 = vmatprep.subr.mxu0 0.0
        %412 = vmatpush2.msra.mxu0 0.0
        %413 = vmatprep.subr.mxu0 0.0
        %414 = vmatpush2.msra.mxu0 0.0
        %415 = vmatprep.subr.mxu0 0.0
        %416 = vmatpush2.msra.mxu0 0.0
        %417 = vmatprep.subr.mxu0 0.0
        %418 = vmatpush2.msra.mxu0 0.0
        %419 = vmatprep.subr.mxu0 0.0
        %420 = vmatpush2.msra.mxu0 0.0
        %421 = vmatprep.subr.mxu0 0.0
        %422 = vmatpush2.msra.mxu0 0.0
        %423 = vmatprep.subr.mxu0 0.0
        %424 = vmatpush2.msra.mxu0 0.0
        %425 = vmatprep.subr.mxu0 0.0
        %426 = vmatpush2.msra.mxu0 0.0
        %427 = vmatprep.subr.mxu0 0.0
        %428 = vmatpush2.msra.mxu0 0.0
        %429 = vmatprep.subr.mxu0 0.0
        %430 = vmatpush2.msra.mxu0 0.0
        %431 = vmatprep.subr.mxu0 0.0
        %432 = vmatpush2.msra.mxu0 0.0
        %433 = vmatprep.subr.mxu0 0.0
        %434 = vmatpush2.msra.mxu0 0.0
        %435 = vmatprep.subr.mxu0 0.0
        %436 = vmatpush2.msra.mxu0 0.0
        %437 = vmatprep.subr.mxu0 0.0
        %438 = vmatpush2.msra.mxu0 0.0
        %439 = vmatprep.subr.mxu0 0.0
        %440 = vmatpush2.msra.mxu0 0.0
        %441 = vmatprep.mubr.f32.mxu0 0.0
        %442 = vmatmul.mubr.f32.gmra.mxu0 %v372
        %v443 = vpop.f32.mrf.mxu0
        %v444 = vadd.f32 %v363, %v443
        %v445 = vpop.f32.mrf.mxu0
        %v446 = vadd.f32 %v363, %v445
        %447 = vmatprep.mubr.f32.mxu0 0.0
        %448 = vmatmul.mubr.f32.gmra.mxu0 %v375
        %v449 = vpop.f32.mrf.mxu0
        %v450 = vadd.f32 %v368, %v449
        %v451 = vpop.f32.mrf.mxu0
        %v452 = vadd.f32 %v368, %v451
        %453 = vdwg.mxu0
        %v454 = vld [vmem:[%s4] sm:$0xff]
        %v455 = vld [vmem:[%s5] sm:$0xff]
        %457 = vset.pattern.permute.xlu0 0
        %458 = vperm.xlu0 %457, %v455
        %v459 = vpop.permute.xlu0 %458
        %vm461 = vcmask 261120
        %v463 = vsel %vm461, %v454, 0
        %465 = vmatprep.subr.mxu0 0.0
        %466 = vmatpush1.msra.mxu0 0.0
        %467 = vmatprep.subr.mxu0 0.0
        %468 = vmatpush1.msra.mxu0 0.0
        %469 = vmatprep.subr.mxu0 0.0
        %470 = vmatpush1.msra.mxu0 0.0
        %471 = vmatprep.subr.mxu0 0.0
        %472 = vmatpush1.msra.mxu0 0.0
        %473 = vmatprep.subr.mxu0 0.0
        %474 = vmatpush1.msra.mxu0 0.0
        %475 = vmatprep.subr.mxu0 0.0
        %476 = vmatpush1.msra.mxu0 0.0
        %477 = vmatprep.subr.mxu0 0.0
        %478 = vmatpush1.msra.mxu0 0.0
        %479 = vmatprep.subr.mxu0 0.0
        %480 = vmatpush1.msra.mxu0 0.0
        %481 = vmatprep.subr.mxu0 0.0
        %482 = vmatpush1.msra.mxu0 0.0
        %483 = vmatprep.subr.mxu0 0.0
        %484 = vmatpush1.msra.mxu0 0.0
        %485 = vmatprep.subr.mxu0 0.0
        %486 = vmatpush1.msra.mxu0 0.0
        %487 = vmatprep.subr.mxu0 0.0
        %488 = vmatpush1.msra.mxu0 0.0
        %489 = vmatprep.subr.mxu0 %v351
        %490 = vmatpush1.msra.mxu0 %v350
        %491 = vmatprep.subr.mxu0 %v349
        %492 = vmatpush1.msra.mxu0 %v348
        %493 = vmatprep.subr.mxu0 %v347
        %494 = vmatpush1.msra.mxu0 %v346
        %495 = vmatprep.subr.mxu0 %v345
        %496 = vmatpush1.msra.mxu0 %v344
        %497 = vmatprep.subr.mxu0 0.0
        %498 = vmatpush2.msra.mxu0 0.0
        %499 = vmatprep.subr.mxu0 0.0
        %500 = vmatpush2.msra.mxu0 0.0
        %501 = vmatprep.subr.mxu0 0.0
        %502 = vmatpush2.msra.mxu0 0.0
        %503 = vmatprep.subr.mxu0 0.0
        %504 = vmatpush2.msra.mxu0 0.0
        %505 = vmatprep.subr.mxu0 0.0
        %506 = vmatpush2.msra.mxu0 0.0
        %507 = vmatprep.subr.mxu0 0.0
        %508 = vmatpush2.msra.mxu0 0.0
        %509 = vmatprep.subr.mxu0 0.0
        %510 = vmatpush2.msra.mxu0 0.0
        %511 = vmatprep.subr.mxu0 0.0
        %512 = vmatpush2.msra.mxu0 0.0
        %513 = vmatprep.subr.mxu0 0.0
        %514 = vmatpush2.msra.mxu0 0.0
        %515 = vmatprep.subr.mxu0 0.0
        %516 = vmatpush2.msra.mxu0 0.0
        %517 = vmatprep.subr.mxu0 0.0
        %518 = vmatpush2.msra.mxu0 0.0
        %519 = vmatprep.subr.mxu0 0.0
        %520 = vmatpush2.msra.mxu0 0.0
        %521 = vmatprep.subr.mxu0 0.0
        %522 = vmatpush2.msra.mxu0 0.0
        %523 = vmatprep.subr.mxu0 0.0
        %524 = vmatpush2.msra.mxu0 0.0
        %525 = vmatprep.subr.mxu0 0.0
        %526 = vmatpush2.msra.mxu0 0.0
        %527 = vmatprep.subr.mxu0 0.0
        %528 = vmatpush2.msra.mxu0 0.0
        %529 = vmatprep.mubr.f32.mxu0 0.0
        %530 = vmatmul.mubr.f32.gmra.mxu0 %v463
        %v531 = vpop.f32.mrf.mxu0
        %v532 = vadd.f32 %v459, %v531
        %v533 = vpop.f32.mrf.mxu0
        %v534 = vadd.f32 %v459, %v533
        %535 = vdwg.mxu0
        %536 = vxpose.xlu0.b32.start [1/16] %v452, 128
        %537 = vxpose.xlu0.b32.cont [2/16] 0.0, 128
        %538 = vxpose.xlu0.b32.cont [3/16] 0.0, 128
        %539 = vxpose.xlu0.b32.cont [4/16] 0.0, 128
        %540 = vxpose.xlu0.b32.cont [5/16] 0.0, 128
        %541 = vxpose.xlu0.b32.cont [6/16] 0.0, 128
        %542 = vxpose.xlu0.b32.cont [7/16] 0.0, 128
        %543 = vxpose.xlu0.b32.cont [8/16] 0.0, 128
        %544 = vxpose.xlu0.b32.cont [9/16] 0.0, 128
        %545 = vxpose.xlu0.b32.cont [10/16] 0.0, 128
        %546 = vxpose.xlu0.b32.cont [11/16] 0.0, 128
        %547 = vxpose.xlu0.b32.cont [12/16] 0.0, 128
        %548 = vxpose.xlu0.b32.cont [13/16] 0.0, 128
        %549 = vxpose.xlu0.b32.cont [14/16] 0.0, 128
        %550 = vxpose.xlu0.b32.cont [15/16] 0.0, 128
        %551 = vxpose.xlu0.b32.end [16/16] 0.0, 128
        %v552 = vpop.trf.xlu0
        %v553 = vpop.trf.xlu0
        %v554 = vpop.trf.xlu0
        %v555 = vpop.trf.xlu0
        %v556 = vpop.trf.xlu0
        %v557 = vpop.trf.xlu0
        %v558 = vpop.trf.xlu0
        %v559 = vpop.trf.xlu0
        %v560 = vpop.trf.xlu0
        %v561 = vpop.trf.xlu0
        %v562 = vpop.trf.xlu0
        %v563 = vpop.trf.xlu0
        %v564 = vpop.trf.xlu0
        %v565 = vpop.trf.xlu0
        %v566 = vpop.trf.xlu0
        %v567 = vpop.trf.xlu0
        %vm568 = vcmask 64512
        %v570 = vsel %vm568, %v552, 0
        %v573 = vsel %vm568, %v553, 0
        %v576 = vsel %vm568, %v554, 0
        %v579 = vsel %vm568, %v555, 0
        %v582 = vsel %vm568, %v556, 0
        %v585 = vsel %vm568, %v557, 0
        %v588 = vsel %vm568, %v558, 0
        %v591 = vsel %vm568, %v559, 0
        %v594 = vsel %vm568, %v560, 0
        %v597 = vsel %vm568, %v561, 0
        %v600 = vsel %vm568, %v562, 0
        %v603 = vsel %vm568, %v563, 0
        %v606 = vsel %vm568, %v564, 0
        %v609 = vsel %vm568, %v565, 0
        %v612 = vsel %vm568, %v566, 0
        %v615 = vsel %vm568, %v567, 0
        %617 = vmatprep.subr.mxu0 0.0
        %618 = vmatpush1.msra.mxu0 0.0
        %619 = vmatprep.subr.mxu0 0.0
        %620 = vmatpush1.msra.mxu0 0.0
        %621 = vmatprep.subr.mxu0 0.0
        %622 = vmatpush1.msra.mxu0 0.0
        %623 = vmatprep.subr.mxu0 0.0
        %624 = vmatpush1.msra.mxu0 0.0
        %625 = vmatprep.subr.mxu0 0.0
        %626 = vmatpush1.msra.mxu0 0.0
        %627 = vmatprep.subr.mxu0 0.0
        %628 = vmatpush1.msra.mxu0 0.0
        %629 = vmatprep.subr.mxu0 0.0
        %630 = vmatpush1.msra.mxu0 0.0
        %631 = vmatprep.subr.mxu0 0.0
        %632 = vmatpush1.msra.mxu0 0.0
        %633 = vmatprep.subr.mxu0 0.0
        %634 = vmatpush1.msra.mxu0 0.0
        %635 = vmatprep.subr.mxu0 0.0
        %636 = vmatpush1.msra.mxu0 0.0
        %637 = vmatprep.subr.mxu0 0.0
        %638 = vmatpush1.msra.mxu0 0.0
        %639 = vmatprep.subr.mxu0 0.0
        %640 = vmatpush1.msra.mxu0 0.0
        %641 = vmatprep.subr.mxu0 0.0
        %642 = vmatpush1.msra.mxu0 0.0
        %643 = vmatprep.subr.mxu0 0.0
        %644 = vmatpush1.msra.mxu0 0.0
        %645 = vmatprep.subr.mxu0 0.0
        %646 = vmatpush1.msra.mxu0 0.0
        %647 = vmatprep.subr.mxu0 0.0
        %648 = vmatpush1.msra.mxu0 %v534
        %649 = vmatprep.subr.mxu0 0.0
        %650 = vmatpush2.msra.mxu0 0.0
        %651 = vmatprep.subr.mxu0 0.0
        %652 = vmatpush2.msra.mxu0 0.0
        %653 = vmatprep.subr.mxu0 0.0
        %654 = vmatpush2.msra.mxu0 0.0
        %655 = vmatprep.subr.mxu0 0.0
        %656 = vmatpush2.msra.mxu0 0.0
        %657 = vmatprep.subr.mxu0 0.0
        %658 = vmatpush2.msra.mxu0 0.0
        %659 = vmatprep.subr.mxu0 0.0
        %660 = vmatpush2.msra.mxu0 0.0
        %661 = vmatprep.subr.mxu0 0.0
        %662 = vmatpush2.msra.mxu0 0.0
        %663 = vmatprep.subr.mxu0 0.0
        %664 = vmatpush2.msra.mxu0 0.0
        %665 = vmatprep.subr.mxu0 0.0
        %666 = vmatpush2.msra.mxu0 0.0
        %667 = vmatprep.subr.mxu0 0.0
        %668 = vmatpush2.msra.mxu0 0.0
        %669 = vmatprep.subr.mxu0 0.0
        %670 = vmatpush2.msra.mxu0 0.0
        %671 = vmatprep.subr.mxu0 0.0
        %672 = vmatpush2.msra.mxu0 0.0
        %673 = vmatprep.subr.mxu0 0.0
        %674 = vmatpush2.msra.mxu0 0.0
        %675 = vmatprep.subr.mxu0 0.0
        %676 = vmatpush2.msra.mxu0 0.0
        %677 = vmatprep.subr.mxu0 0.0
        %678 = vmatpush2.msra.mxu0 0.0
        %679 = vmatprep.subr.mxu0 0.0
        %680 = vmatpush2.msra.mxu0 0.0
        %681 = vmatprep.mubr.f32.mxu0 0.0
        %682 = vmatmul.mubr.f32.gmra.mxu0 %v570
        %v683 = vpop.f32.mrf.mxu0
        %v684 = vadd.f32 0.0, %v683
        %v685 = vpop.f32.mrf.mxu0
        %686 = vmatprep.mubr.f32.mxu0 0.0
        %687 = vmatmul.mubr.f32.gmra.mxu0 %v573
        %v688 = vpop.f32.mrf.mxu0
        %v689 = vadd.f32 0.0, %v688
        %v690 = vpop.f32.mrf.mxu0
        %691 = vmatprep.mubr.f32.mxu0 0.0
        %692 = vmatmul.mubr.f32.gmra.mxu0 %v576
        %v693 = vpop.f32.mrf.mxu0
        %v694 = vadd.f32 0.0, %v693
        %v695 = vpop.f32.mrf.mxu0
        %696 = vmatprep.mubr.f32.mxu0 0.0
        %697 = vmatmul.mubr.f32.gmra.mxu0 %v579
        %v698 = vpop.f32.mrf.mxu0
        %v699 = vadd.f32 0.0, %v698
        %v700 = vpop.f32.mrf.mxu0
        %701 = vmatprep.mubr.f32.mxu0 0.0
        %702 = vmatmul.mubr.f32.gmra.mxu0 %v582
        %v703 = vpop.f32.mrf.mxu0
        %v704 = vadd.f32 0.0, %v703
        %v705 = vpop.f32.mrf.mxu0
        %706 = vmatprep.mubr.f32.mxu0 0.0
        %707 = vmatmul.mubr.f32.gmra.mxu0 %v585
        %v708 = vpop.f32.mrf.mxu0
        %v709 = vadd.f32 0.0, %v708
        %v710 = vpop.f32.mrf.mxu0
        %711 = vmatprep.mubr.f32.mxu0 0.0
        %712 = vmatmul.mubr.f32.gmra.mxu0 %v588
        %v713 = vpop.f32.mrf.mxu0
        %v714 = vadd.f32 0.0, %v713
        %v715 = vpop.f32.mrf.mxu0
        %716 = vmatprep.mubr.f32.mxu0 0.0
        %717 = vmatmul.mubr.f32.gmra.mxu0 %v591
        %v718 = vpop.f32.mrf.mxu0
        %v719 = vadd.f32 0.0, %v718
        %v720 = vpop.f32.mrf.mxu0
        %721 = vmatprep.mubr.f32.mxu0 0.0
        %722 = vmatmul.mubr.f32.gmra.mxu0 %v594
        %v723 = vpop.f32.mrf.mxu0
        %v724 = vadd.f32 0.0, %v723
        %v725 = vpop.f32.mrf.mxu0
        %726 = vmatprep.mubr.f32.mxu0 0.0
        %727 = vmatmul.mubr.f32.gmra.mxu0 %v597
        %v728 = vpop.f32.mrf.mxu0
        %v729 = vadd.f32 0.0, %v728
        %v730 = vpop.f32.mrf.mxu0
        %731 = vmatprep.mubr.f32.mxu0 0.0
        %732 = vmatmul.mubr.f32.gmra.mxu0 %v600
        %v733 = vpop.f32.mrf.mxu0
        %v734 = vadd.f32 0.0, %v733
        %v735 = vpop.f32.mrf.mxu0
        %736 = vmatprep.mubr.f32.mxu0 0.0
        %737 = vmatmul.mubr.f32.gmra.mxu0 %v603
        %v738 = vpop.f32.mrf.mxu0
        %v739 = vadd.f32 0.0, %v738
        %v740 = vpop.f32.mrf.mxu0
        %741 = vmatprep.mubr.f32.mxu0 0.0
        %742 = vmatmul.mubr.f32.gmra.mxu0 %v606
        %v743 = vpop.f32.mrf.mxu0
        %v744 = vadd.f32 0.0, %v743
        %v745 = vpop.f32.mrf.mxu0
        %746 = vmatprep.mubr.f32.mxu0 0.0
        %747 = vmatmul.mubr.f32.gmra.mxu0 %v609
        %v748 = vpop.f32.mrf.mxu0
        %v749 = vadd.f32 0.0, %v748
        %v750 = vpop.f32.mrf.mxu0
        %751 = vmatprep.mubr.f32.mxu0 0.0
        %752 = vmatmul.mubr.f32.gmra.mxu0 %v612
        %v753 = vpop.f32.mrf.mxu0
        %v754 = vadd.f32 0.0, %v753
        %v755 = vpop.f32.mrf.mxu0
        %756 = vmatprep.mubr.f32.mxu0 0.0
        %757 = vmatmul.mubr.f32.gmra.mxu0 %v615
        %v758 = vpop.f32.mrf.mxu0
        %v759 = vadd.f32 0.0, %v758
        %v760 = vpop.f32.mrf.mxu0
        %761 = vdwg.mxu0
        %762 = vxpose.xlu0.b32.start [1/16] %v450, 128
        %763 = vxpose.xlu0.b32.cont [2/16] 0.0, 128
        %764 = vxpose.xlu0.b32.cont [3/16] 0.0, 128
        %765 = vxpose.xlu0.b32.cont [4/16] 0.0, 128
        %766 = vxpose.xlu0.b32.cont [5/16] 0.0, 128
        %767 = vxpose.xlu0.b32.cont [6/16] 0.0, 128
        %768 = vxpose.xlu0.b32.cont [7/16] 0.0, 128
        %769 = vxpose.xlu0.b32.cont [8/16] 0.0, 128
        %770 = vxpose.xlu0.b32.cont [9/16] 0.0, 128
        %771 = vxpose.xlu0.b32.cont [10/16] 0.0, 128
        %772 = vxpose.xlu0.b32.cont [11/16] 0.0, 128
        %773 = vxpose.xlu0.b32.cont [12/16] 0.0, 128
        %774 = vxpose.xlu0.b32.cont [13/16] 0.0, 128
        %775 = vxpose.xlu0.b32.cont [14/16] 0.0, 128
        %776 = vxpose.xlu0.b32.cont [15/16] 0.0, 128
        %777 = vxpose.xlu0.b32.end [16/16] 0.0, 128
        %v778 = vpop.trf.xlu0
        %v779 = vpop.trf.xlu0
        %v780 = vpop.trf.xlu0
        %v781 = vpop.trf.xlu0
        %v782 = vpop.trf.xlu0
        %v783 = vpop.trf.xlu0
        %v784 = vpop.trf.xlu0
        %v785 = vpop.trf.xlu0
        %v786 = vpop.trf.xlu0
        %v787 = vpop.trf.xlu0
        %v788 = vpop.trf.xlu0
        %v789 = vpop.trf.xlu0
        %v790 = vpop.trf.xlu0
        %v791 = vpop.trf.xlu0
        %v792 = vpop.trf.xlu0
        %v793 = vpop.trf.xlu0
        %v795 = vsel %vm568, %v778, 0
        %v798 = vsel %vm568, %v779, 0
        %v801 = vsel %vm568, %v780, 0
        %v804 = vsel %vm568, %v781, 0
        %v807 = vsel %vm568, %v782, 0
        %v810 = vsel %vm568, %v783, 0
        %v813 = vsel %vm568, %v784, 0
        %v816 = vsel %vm568, %v785, 0
        %v819 = vsel %vm568, %v786, 0
        %v822 = vsel %vm568, %v787, 0
        %v825 = vsel %vm568, %v788, 0
        %v828 = vsel %vm568, %v789, 0
        %v831 = vsel %vm568, %v790, 0
        %v834 = vsel %vm568, %v791, 0
        %v837 = vsel %vm568, %v792, 0
        %v840 = vsel %vm568, %v793, 0
        %842 = vmatprep.subr.mxu0 0.0
        %843 = vmatpush1.msra.mxu0 0.0
        %844 = vmatprep.subr.mxu0 0.0
        %845 = vmatpush1.msra.mxu0 0.0
        %846 = vmatprep.subr.mxu0 0.0
        %847 = vmatpush1.msra.mxu0 0.0
        %848 = vmatprep.subr.mxu0 0.0
        %849 = vmatpush1.msra.mxu0 0.0
        %850 = vmatprep.subr.mxu0 0.0
        %851 = vmatpush1.msra.mxu0 0.0
        %852 = vmatprep.subr.mxu0 0.0
        %853 = vmatpush1.msra.mxu0 0.0
        %854 = vmatprep.subr.mxu0 0.0
        %855 = vmatpush1.msra.mxu0 0.0
        %856 = vmatprep.subr.mxu0 0.0
        %857 = vmatpush1.msra.mxu0 0.0
        %858 = vmatprep.subr.mxu0 0.0
        %859 = vmatpush1.msra.mxu0 0.0
        %860 = vmatprep.subr.mxu0 0.0
        %861 = vmatpush1.msra.mxu0 0.0
        %862 = vmatprep.subr.mxu0 0.0
        %863 = vmatpush1.msra.mxu0 0.0
        %864 = vmatprep.subr.mxu0 0.0
        %865 = vmatpush1.msra.mxu0 0.0
        %866 = vmatprep.subr.mxu0 0.0
        %867 = vmatpush1.msra.mxu0 0.0
        %868 = vmatprep.subr.mxu0 0.0
        %869 = vmatpush1.msra.mxu0 0.0
        %870 = vmatprep.subr.mxu0 0.0
        %871 = vmatpush1.msra.mxu0 0.0
        %872 = vmatprep.subr.mxu0 0.0
        %873 = vmatpush1.msra.mxu0 %v532
        %874 = vmatprep.subr.mxu0 0.0
        %875 = vmatpush2.msra.mxu0 0.0
        %876 = vmatprep.subr.mxu0 0.0
        %877 = vmatpush2.msra.mxu0 0.0
        %878 = vmatprep.subr.mxu0 0.0
        %879 = vmatpush2.msra.mxu0 0.0
        %880 = vmatprep.subr.mxu0 0.0
        %881 = vmatpush2.msra.mxu0 0.0
        %882 = vmatprep.subr.mxu0 0.0
        %883 = vmatpush2.msra.mxu0 0.0
        %884 = vmatprep.subr.mxu0 0.0
        %885 = vmatpush2.msra.mxu0 0.0
        %886 = vmatprep.subr.mxu0 0.0
        %887 = vmatpush2.msra.mxu0 0.0
        %888 = vmatprep.subr.mxu0 0.0
        %889 = vmatpush2.msra.mxu0 0.0
        %890 = vmatprep.subr.mxu0 0.0
        %891 = vmatpush2.msra.mxu0 0.0
        %892 = vmatprep.subr.mxu0 0.0
        %893 = vmatpush2.msra.mxu0 0.0
        %894 = vmatprep.subr.mxu0 0.0
        %895 = vmatpush2.msra.mxu0 0.0
        %896 = vmatprep.subr.mxu0 0.0
        %897 = vmatpush2.msra.mxu0 0.0
        %898 = vmatprep.subr.mxu0 0.0
        %899 = vmatpush2.msra.mxu0 0.0
        %900 = vmatprep.subr.mxu0 0.0
        %901 = vmatpush2.msra.mxu0 0.0
        %902 = vmatprep.subr.mxu0 0.0
        %903 = vmatpush2.msra.mxu0 0.0
        %904 = vmatprep.subr.mxu0 0.0
        %905 = vmatpush2.msra.mxu0 0.0
        %906 = vmatprep.mubr.f32.mxu0 0.0
        %907 = vmatmul.mubr.f32.gmra.mxu0 %v795
        %v908 = vpop.f32.mrf.mxu0
        %v909 = vadd.f32 %v684, %v908
        %v910 = vpop.f32.mrf.mxu0
        %911 = vmatprep.mubr.f32.mxu0 0.0
        %912 = vmatmul.mubr.f32.gmra.mxu0 %v798
        %v913 = vpop.f32.mrf.mxu0
        %v914 = vadd.f32 %v689, %v913
        %v915 = vpop.f32.mrf.mxu0
        %916 = vmatprep.mubr.f32.mxu0 0.0
        %917 = vmatmul.mubr.f32.gmra.mxu0 %v801
        %v918 = vpop.f32.mrf.mxu0
        %v919 = vadd.f32 %v694, %v918
        %v920 = vpop.f32.mrf.mxu0
        %921 = vmatprep.mubr.f32.mxu0 0.0
        %922 = vmatmul.mubr.f32.gmra.mxu0 %v804
        %v923 = vpop.f32.mrf.mxu0
        %v924 = vadd.f32 %v699, %v923
        %v925 = vpop.f32.mrf.mxu0
        %926 = vmatprep.mubr.f32.mxu0 0.0
        %927 = vmatmul.mubr.f32.gmra.mxu0 %v807
        %v928 = vpop.f32.mrf.mxu0
        %v929 = vadd.f32 %v704, %v928
        %v930 = vpop.f32.mrf.mxu0
        %931 = vmatprep.mubr.f32.mxu0 0.0
        %932 = vmatmul.mubr.f32.gmra.mxu0 %v810
        %v933 = vpop.f32.mrf.mxu0
        %v934 = vadd.f32 %v709, %v933
        %v935 = vpop.f32.mrf.mxu0
        %936 = vmatprep.mubr.f32.mxu0 0.0
        %937 = vmatmul.mubr.f32.gmra.mxu0 %v813
        %v938 = vpop.f32.mrf.mxu0
        %v939 = vadd.f32 %v714, %v938
        %v940 = vpop.f32.mrf.mxu0
        %941 = vmatprep.mubr.f32.mxu0 0.0
        %942 = vmatmul.mubr.f32.gmra.mxu0 %v816
        %v943 = vpop.f32.mrf.mxu0
        %v944 = vadd.f32 %v719, %v943
        %v945 = vpop.f32.mrf.mxu0
        %946 = vmatprep.mubr.f32.mxu0 0.0
        %947 = vmatmul.mubr.f32.gmra.mxu0 %v819
        %v948 = vpop.f32.mrf.mxu0
        %v949 = vadd.f32 %v724, %v948
        %v950 = vpop.f32.mrf.mxu0
        %951 = vmatprep.mubr.f32.mxu0 0.0
        %952 = vmatmul.mubr.f32.gmra.mxu0 %v822
        %v953 = vpop.f32.mrf.mxu0
        %v954 = vadd.f32 %v729, %v953
        %v955 = vpop.f32.mrf.mxu0
        %956 = vmatprep.mubr.f32.mxu0 0.0
        %957 = vmatmul.mubr.f32.gmra.mxu0 %v825
        %v958 = vpop.f32.mrf.mxu0
        %v959 = vadd.f32 %v734, %v958
        %v960 = vpop.f32.mrf.mxu0
        %961 = vmatprep.mubr.f32.mxu0 0.0
        %962 = vmatmul.mubr.f32.gmra.mxu0 %v828
        %v963 = vpop.f32.mrf.mxu0
        %v964 = vadd.f32 %v739, %v963
        %v965 = vpop.f32.mrf.mxu0
        %966 = vmatprep.mubr.f32.mxu0 0.0
        %967 = vmatmul.mubr.f32.gmra.mxu0 %v831
        %v968 = vpop.f32.mrf.mxu0
        %v969 = vadd.f32 %v744, %v968
        %v970 = vpop.f32.mrf.mxu0
        %971 = vmatprep.mubr.f32.mxu0 0.0
        %972 = vmatmul.mubr.f32.gmra.mxu0 %v834
        %v973 = vpop.f32.mrf.mxu0
        %v974 = vadd.f32 %v749, %v973
        %v975 = vpop.f32.mrf.mxu0
        %976 = vmatprep.mubr.f32.mxu0 0.0
        %977 = vmatmul.mubr.f32.gmra.mxu0 %v837
        %v978 = vpop.f32.mrf.mxu0
        %v979 = vadd.f32 %v754, %v978
        %v980 = vpop.f32.mrf.mxu0
        %981 = vmatprep.mubr.f32.mxu0 0.0
        %982 = vmatmul.mubr.f32.gmra.mxu0 %v840
        %v983 = vpop.f32.mrf.mxu0
        %v984 = vadd.f32 %v759, %v983
        %v985 = vpop.f32.mrf.mxu0
        %986 = vdwg.mxu0
        %987 = vmatprep.subr.mxu0 0.0
        %988 = vmatpush1.msra.mxu0 %v984
        %989 = vmatprep.subr.mxu0 0.0
        %990 = vmatpush1.msra.mxu0 %v979
        %991 = vmatprep.subr.mxu0 0.0
        %992 = vmatpush1.msra.mxu0 %v974
        %993 = vmatprep.subr.mxu0 0.0
        %994 = vmatpush1.msra.mxu0 %v969
        %995 = vmatprep.subr.mxu0 0.0
        %996 = vmatpush1.msra.mxu0 %v964
        %997 = vmatprep.subr.mxu0 0.0
        %998 = vmatpush1.msra.mxu0 %v959
        %999 = vmatprep.subr.mxu0 0.0
        %1000 = vmatpush1.msra.mxu0 %v954
        %1001 = vmatprep.subr.mxu0 0.0
        %1002 = vmatpush1.msra.mxu0 %v949
        %1003 = vmatprep.subr.mxu0 0.0
        %1004 = vmatpush1.msra.mxu0 %v944
        %1005 = vmatprep.subr.mxu0 0.0
        %1006 = vmatpush1.msra.mxu0 %v939
        %1007 = vmatprep.subr.mxu0 0.0
        %1008 = vmatpush1.msra.mxu0 %v934
        %1009 = vmatprep.subr.mxu0 0.0
        %1010 = vmatpush1.msra.mxu0 %v929
        %1011 = vmatprep.subr.mxu0 0.0
        %1012 = vmatpush1.msra.mxu0 %v924
        %1013 = vmatprep.subr.mxu0 0.0
        %1014 = vmatpush1.msra.mxu0 %v919
        %1015 = vmatprep.subr.mxu0 0.0
        %1016 = vmatpush1.msra.mxu0 %v914
        %1017 = vmatprep.subr.mxu0 0.0
        %1018 = vmatpush1.msra.mxu0 %v909
        %1019 = vmatprep.subr.mxu0 0.0
        %1020 = vmatpush2.msra.mxu0 0.0
        %1021 = vmatprep.subr.mxu0 0.0
        %1022 = vmatpush2.msra.mxu0 0.0
        %1023 = vmatprep.subr.mxu0 0.0
        %1024 = vmatpush2.msra.mxu0 0.0
        %1025 = vmatprep.subr.mxu0 0.0
        %1026 = vmatpush2.msra.mxu0 0.0
        %1027 = vmatprep.subr.mxu0 0.0
        %1028 = vmatpush2.msra.mxu0 0.0
        %1029 = vmatprep.subr.mxu0 0.0
        %1030 = vmatpush2.msra.mxu0 0.0
        %1031 = vmatprep.subr.mxu0 0.0
        %1032 = vmatpush2.msra.mxu0 0.0
        %1033 = vmatprep.subr.mxu0 0.0
        %1034 = vmatpush2.msra.mxu0 0.0
        %1035 = vmatprep.subr.mxu0 0.0
        %1036 = vmatpush2.msra.mxu0 0.0
        %1037 = vmatprep.subr.mxu0 0.0
        %1038 = vmatpush2.msra.mxu0 0.0
        %1039 = vmatprep.subr.mxu0 0.0
        %1040 = vmatpush2.msra.mxu0 0.0
        %1041 = vmatprep.subr.mxu0 0.0
        %1042 = vmatpush2.msra.mxu0 0.0
        %1043 = vmatprep.subr.mxu0 0.0
        %1044 = vmatpush2.msra.mxu0 0.0
        %1045 = vmatprep.subr.mxu0 0.0
        %1046 = vmatpush2.msra.mxu0 0.0
        %1047 = vmatprep.subr.mxu0 0.0
        %1048 = vmatpush2.msra.mxu0 0.0
        %1049 = vmatprep.subr.mxu0 0.0
        %1050 = vmatpush2.msra.mxu0 0.0
        %1051 = vmatprep.mubr.f32.mxu0 0.0
        %1052 = vmatmul.mubr.f32.gmra.mxu0 %v444
        %v1053 = vpop.f32.mrf.mxu0
        %v1054 = vadd.f32 0.0, %v1053
        %v1055 = vpop.f32.mrf.mxu0
        %1056 = vdwg.mxu0
        %1057 = vmatprep.subr.mxu0 0.0
        %1058 = vmatpush1.msra.mxu0 %v984
        %1059 = vmatprep.subr.mxu0 0.0
        %1060 = vmatpush1.msra.mxu0 %v979
        %1061 = vmatprep.subr.mxu0 0.0
        %1062 = vmatpush1.msra.mxu0 %v974
        %1063 = vmatprep.subr.mxu0 0.0
        %1064 = vmatpush1.msra.mxu0 %v969
        %1065 = vmatprep.subr.mxu0 0.0
        %1066 = vmatpush1.msra.mxu0 %v964
        %1067 = vmatprep.subr.mxu0 0.0
        %1068 = vmatpush1.msra.mxu0 %v959
        %1069 = vmatprep.subr.mxu0 0.0
        %1070 = vmatpush1.msra.mxu0 %v954
        %1071 = vmatprep.subr.mxu0 0.0
        %1072 = vmatpush1.msra.mxu0 %v949
        %1073 = vmatprep.subr.mxu0 0.0
        %1074 = vmatpush1.msra.mxu0 %v944
        %1075 = vmatprep.subr.mxu0 0.0
        %1076 = vmatpush1.msra.mxu0 %v939
        %1077 = vmatprep.subr.mxu0 0.0
        %1078 = vmatpush1.msra.mxu0 %v934
        %1079 = vmatprep.subr.mxu0 0.0
        %1080 = vmatpush1.msra.mxu0 %v929
        %1081 = vmatprep.subr.mxu0 0.0
        %1082 = vmatpush1.msra.mxu0 %v924
        %1083 = vmatprep.subr.mxu0 0.0
        %1084 = vmatpush1.msra.mxu0 %v919
        %1085 = vmatprep.subr.mxu0 0.0
        %1086 = vmatpush1.msra.mxu0 %v914
        %1087 = vmatprep.subr.mxu0 0.0
        %1088 = vmatpush1.msra.mxu0 %v909
        %1089 = vmatprep.subr.mxu0 0.0
        %1090 = vmatpush2.msra.mxu0 0.0
        %1091 = vmatprep.subr.mxu0 0.0
        %1092 = vmatpush2.msra.mxu0 0.0
        %1093 = vmatprep.subr.mxu0 0.0
        %1094 = vmatpush2.msra.mxu0 0.0
        %1095 = vmatprep.subr.mxu0 0.0
        %1096 = vmatpush2.msra.mxu0 0.0
        %1097 = vmatprep.subr.mxu0 0.0
        %1098 = vmatpush2.msra.mxu0 0.0
        %1099 = vmatprep.subr.mxu0 0.0
        %1100 = vmatpush2.msra.mxu0 0.0
        %1101 = vmatprep.subr.mxu0 0.0
        %1102 = vmatpush2.msra.mxu0 0.0
        %1103 = vmatprep.subr.mxu0 0.0
        %1104 = vmatpush2.msra.mxu0 0.0
        %1105 = vmatprep.subr.mxu0 0.0
        %1106 = vmatpush2.msra.mxu0 0.0
        %1107 = vmatprep.subr.mxu0 0.0
        %1108 = vmatpush2.msra.mxu0 0.0
        %1109 = vmatprep.subr.mxu0 0.0
        %1110 = vmatpush2.msra.mxu0 0.0
        %1111 = vmatprep.subr.mxu0 0.0
        %1112 = vmatpush2.msra.mxu0 0.0
        %1113 = vmatprep.subr.mxu0 0.0
        %1114 = vmatpush2.msra.mxu0 0.0
        %1115 = vmatprep.subr.mxu0 0.0
        %1116 = vmatpush2.msra.mxu0 0.0
        %1117 = vmatprep.subr.mxu0 0.0
        %1118 = vmatpush2.msra.mxu0 0.0
        %1119 = vmatprep.subr.mxu0 0.0
        %1120 = vmatpush2.msra.mxu0 0.0
        %1121 = vmatprep.mubr.f32.mxu0 0.0
        %1122 = vmatmul.mubr.f32.gmra.mxu0 %v446
        %v1123 = vpop.f32.mrf.mxu0
        %v1124 = vadd.f32 0.0, %v1123
        %v1125 = vpop.f32.mrf.mxu0
        %1126 = vdwg.mxu0
        %v1127 = vld [vmem:[%s6] sm:$0xff]
        %v1128 = vld [vmem:[%s6 + $0x8] sm:$0xff]
        %v1129 = vld [vmem:[%s6 + $0x10] sm:$0xff]
        %v1130 = vld [vmem:[%s6 + $0x18] sm:$0xff]
        %v1131 = vld [vmem:[%s7] sm:$0xff]
        %v1132 = vld [vmem:[%s7 + $0x8] sm:$0xff]
        %v1133 = vld [vmem:[%s7 + $0x10] sm:$0xff]
        %v1134 = vld [vmem:[%s7 + $0x18] sm:$0xff]
        %1136 = vset.pattern.permute.xlu0 0
        %1137 = vperm.xlu0 %1136, %v1131
        %v1138 = vpop.permute.xlu0 %1137
        %1141 = vset.pattern.permute.xlu0 0
        %1142 = vperm.xlu0 %1141, %v1132
        %v1143 = vpop.permute.xlu0 %1142
        %1146 = vset.pattern.permute.xlu0 0
        %1147 = vperm.xlu0 %1146, %v1133
        %v1148 = vpop.permute.xlu0 %1147
        %1151 = vset.pattern.permute.xlu0 0
        %1152 = vperm.xlu0 %1151, %v1134
        %v1153 = vpop.permute.xlu0 %1152
        %v1156 = vsel %vm568, %v1127, 0
        %v1159 = vsel %vm568, %v1128, 0
        %v1162 = vsel %vm568, %v1129, 0
        %v1165 = vsel %vm568, %v1130, 0
        %1167 = vmatprep.subr.mxu0 0.0
        %1168 = vmatpush1.msra.mxu0 0.0
        %1169 = vmatprep.subr.mxu0 0.0
        %1170 = vmatpush1.msra.mxu0 0.0
        %1171 = vmatprep.subr.mxu0 0.0
        %1172 = vmatpush1.msra.mxu0 0.0
        %1173 = vmatprep.subr.mxu0 0.0
        %1174 = vmatpush1.msra.mxu0 0.0
        %1175 = vmatprep.subr.mxu0 0.0
        %1176 = vmatpush1.msra.mxu0 0.0
        %1177 = vmatprep.subr.mxu0 0.0
        %1178 = vmatpush1.msra.mxu0 0.0
        %1179 = vmatprep.subr.mxu0 0.0
        %1180 = vmatpush1.msra.mxu0 0.0
        %1181 = vmatprep.subr.mxu0 0.0
        %1182 = vmatpush1.msra.mxu0 0.0
        %1183 = vmatprep.subr.mxu0 0.0
        %1184 = vmatpush1.msra.mxu0 0.0
        %1185 = vmatprep.subr.mxu0 0.0
        %1186 = vmatpush1.msra.mxu0 0.0
        %1187 = vmatprep.subr.mxu0 0.0
        %1188 = vmatpush1.msra.mxu0 0.0
        %1189 = vmatprep.subr.mxu0 0.0
        %1190 = vmatpush1.msra.mxu0 0.0
        %1191 = vmatprep.subr.mxu0 0.0
        %1192 = vmatpush1.msra.mxu0 0.0
        %1193 = vmatprep.subr.mxu0 0.0
        %1194 = vmatpush1.msra.mxu0 0.0
        %1195 = vmatprep.subr.mxu0 0.0
        %1196 = vmatpush1.msra.mxu0 0.0
        %1197 = vmatprep.subr.mxu0 %v1124
        %1198 = vmatpush1.msra.mxu0 %v1054
        %1199 = vmatprep.subr.mxu0 0.0
        %1200 = vmatpush2.msra.mxu0 0.0
        %1201 = vmatprep.subr.mxu0 0.0
        %1202 = vmatpush2.msra.mxu0 0.0
        %1203 = vmatprep.subr.mxu0 0.0
        %1204 = vmatpush2.msra.mxu0 0.0
        %1205 = vmatprep.subr.mxu0 0.0
        %1206 = vmatpush2.msra.mxu0 0.0
        %1207 = vmatprep.subr.mxu0 0.0
        %1208 = vmatpush2.msra.mxu0 0.0
        %1209 = vmatprep.subr.mxu0 0.0
        %1210 = vmatpush2.msra.mxu0 0.0
        %1211 = vmatprep.subr.mxu0 0.0
        %1212 = vmatpush2.msra.mxu0 0.0
        %1213 = vmatprep.subr.mxu0 0.0
        %1214 = vmatpush2.msra.mxu0 0.0
        %1215 = vmatprep.subr.mxu0 0.0
        %1216 = vmatpush2.msra.mxu0 0.0
        %1217 = vmatprep.subr.mxu0 0.0
        %1218 = vmatpush2.msra.mxu0 0.0
        %1219 = vmatprep.subr.mxu0 0.0
        %1220 = vmatpush2.msra.mxu0 0.0
        %1221 = vmatprep.subr.mxu0 0.0
        %1222 = vmatpush2.msra.mxu0 0.0
        %1223 = vmatprep.subr.mxu0 0.0
        %1224 = vmatpush2.msra.mxu0 0.0
        %1225 = vmatprep.subr.mxu0 0.0
        %1226 = vmatpush2.msra.mxu0 0.0
        %1227 = vmatprep.subr.mxu0 0.0
        %1228 = vmatpush2.msra.mxu0 0.0
        %1229 = vmatprep.subr.mxu0 0.0
        %1230 = vmatpush2.msra.mxu0 0.0
        %1231 = vmatprep.mubr.f32.mxu0 0.0
        %1232 = vmatmul.mubr.f32.gmra.mxu0 %v1156
        %v1233 = vpop.f32.mrf.mxu0
        %v1234 = vadd.f32 %v1138, %v1233
        %v1235 = vpop.f32.mrf.mxu0
        %v1236 = vadd.f32 %v1138, %v1235
        %1237 = vmatprep.mubr.f32.mxu0 0.0
        %1238 = vmatmul.mubr.f32.gmra.mxu0 %v1159
        %v1239 = vpop.f32.mrf.mxu0
        %v1240 = vadd.f32 %v1143, %v1239
        %v1241 = vpop.f32.mrf.mxu0
        %v1242 = vadd.f32 %v1143, %v1241
        %1243 = vmatprep.mubr.f32.mxu0 0.0
        %1244 = vmatmul.mubr.f32.gmra.mxu0 %v1162
        %v1245 = vpop.f32.mrf.mxu0
        %v1246 = vadd.f32 %v1148, %v1245
        %v1247 = vpop.f32.mrf.mxu0
        %v1248 = vadd.f32 %v1148, %v1247
        %1249 = vmatprep.mubr.f32.mxu0 0.0
        %1250 = vmatmul.mubr.f32.gmra.mxu0 %v1165
        %v1251 = vpop.f32.mrf.mxu0
        %v1252 = vadd.f32 %v1153, %v1251
        %v1253 = vpop.f32.mrf.mxu0
        %v1254 = vadd.f32 %v1153, %v1253
        %1255 = vdwg.mxu0
        %v1256 = vadd.f32 %v1234, %v344
        %v1257 = vadd.f32 %v1236, %v345
        %v1258 = vadd.f32 %v1240, %v346
        %v1259 = vadd.f32 %v1242, %v347
        %v1260 = vadd.f32 %v1246, %v348
        %v1261 = vadd.f32 %v1248, %v349
        %v1262 = vadd.f32 %v1252, %v350
        %v1263 = vadd.f32 %v1254, %v351
        %1264 = vst [vmem:[%s338] sm:$0xff] %v1256
        %1265 = vst [vmem:[%s338 + $0x8] sm:$0xff] %v1257
        %1266 = vst [vmem:[%s338 + $0x10] sm:$0xff] %v1258
        %1267 = vst [vmem:[%s338 + $0x18] sm:$0xff] %v1259
        %1268 = vst [vmem:[%s338 + $0x20] sm:$0xff] %v1260
        %1269 = vst [vmem:[%s338 + $0x28] sm:$0xff] %v1261
        %1270 = vst [vmem:[%s338 + $0x30] sm:$0xff] %v1262
        %1271 = vst [vmem:[%s338 + $0x38] sm:$0xff] %v1263
        %s1272 = sand.u32 %s211, 1
        %s1273 = scalar_lea.sflag [#allocation4], %s1272
        %s1274 = sand.u32 %s211, 1
        %s1275 = smul.addr %s1274, 64
        %s1276 = scalar_lea.vmem [#allocation5], %s1275
        // Predicated region
        $region57: #{tpu_custom_call.1} parent=51 // pred_check
          %p1277 = pneg %p221
        $region58: #{tpu_custom_call.1} parent=51 // pred_check_branch
          %1279 = sbr.rel (%p1277) target = $region60
        $region59: #{tpu_custom_call.1} parent=51 // pred_region
          %s1281 = ssub.s32 1024, 1024
          %1282 = vsyncadd %s1273, %s1281
          %s1283 = smul.addr %s25, 8
          %s1284 = smul.addr %s1283, 128
          %s1285 = scalar_lea.hbm %s8, %s1284
          %s1286 = sshll.u32 %s1276, 4
          %s1287 = int_to_ptr.vmem [resolvable:$true] %s1286
          %1292 = dma.vmem_to_hbm [thread:$0]  %s1287, 1024, %s1285, %s1273, 256, 256, 16
        $region60: #{tpu_custom_call.1} parent=51 // pred_fallthru
          _
      $region52: #{tpu_custom_call.1} parent=5 // pred_fallthru
        _
      %p1293 = scmp.le.s32.totalorder 2, %s20
      // Predicated region
      $region61: #{tpu_custom_call.1} parent=5 // pred_check
        %p1294 = pneg %p1293
      $region62: #{tpu_custom_call.1} parent=5 // pred_check_branch
        %1296 = sbr.rel (%p1294) target = $region64
      $region63: #{tpu_custom_call.1} parent=5 // pred_region
        %s1297 = ssub.s32 %s20, 2
        // Predicated region
        $region65: #{tpu_custom_call.1} parent=63 // pred_check
          %p1298 = pneg %p227
        $region66: #{tpu_custom_call.1} parent=63 // pred_check_branch
          %1300 = sbr.rel (%p1298) target = $region68
        $region67: #{tpu_custom_call.1} parent=63 // pred_region
          %s1301 = sand.u32 %s212, 1
          %s1302 = scalar_lea.sflag [#allocation4], %s1301
          %s1303 = sand.u32 %s212, 1
          %s1304 = smul.addr %s1303, 64
          %s1305 = scalar_lea.vmem [#allocation5], %s1304
          %1306 = dma.done %s1302, 1024
        $region68: #{tpu_custom_call.1} parent=63 // pred_fallthru
          _
      $region64: #{tpu_custom_call.1} parent=5 // pred_fallthru
        _
    $region6: #{tpu_custom_call.1} parent=1 // loop_footer
      %s24 = sadd.s32 1, %s20
    $region7: #{tpu_custom_call.1} parent=1 // loop_footer_branch
      %19 = sbr.rel target = $region3
    $region8: #{tpu_custom_call.1} parent=1 // loop_exit
      _
    %1307 = vsyncpa [#allocation3], 1
    %s1308 = scalar_lea.sflag [#allocation3], 1
    %1309 = vsyncpa %s1308, 1
    %1310 = vsyncpa [#allocation4], 1
    %s1311 = scalar_lea.sflag [#allocation4], 1
    %1312 = vsyncpa %s1311, 1

</llo_original>
